<compile_context>
chip_gen: v6e
topology: v6e:2x2x1
jax: 0.10.0
libtpu: 0.0.40
codegen_flags: <defaults>
</compile_context>

<pallas_src>
import jax
import jax.numpy as jnp
from jax.experimental import pallas as pl
from jax.experimental.pallas import tpu as pltpu


def lstm_bot_kernel(obs_ref, s_mu_ref, s_std_ref,
                    w_enc_ref, b_enc_ref,
                    w_lstm_ref, b_lstm_ref,
                    state_in_ref,
                    tok_emb_ref, len_ref,
                    w_act_ref, b_act_ref,
                    mean_ref, state_out_ref,
                    xh_ref, cat_ref):
    H = w_enc_ref.shape[1]
    L = w_lstm_ref.shape[0]
    B = tok_emb_ref.shape[0]
    T = tok_emb_ref.shape[1]

    # --- encode_obs: snorm.normalize + inp_enc Linear ---------------------
    obs = obs_ref[...].astype(jnp.float32)
    x = (obs - s_mu_ref[...]) / s_std_ref[...]
    x = jnp.dot(x, w_enc_ref[...], preferred_element_type=jnp.float32) + b_enc_ref[...]

    # --- LayerNorm(hidden, elementwise_affine=False), eps=1e-5 ------------
    mu = jnp.mean(x, axis=-1, keepdims=True)
    var = jnp.mean((x - mu) ** 2, axis=-1, keepdims=True)
    inputs = (x - mu) * jax.lax.rsqrt(var + 1e-5)

    # --- env_emb: masked mean pooling over token embeddings ---------------
    lengths = len_ref[...]                                           # (B, 1) f32
    pos = jax.lax.broadcasted_iota(jnp.int32, (B, T), 1).astype(jnp.float32)
    mask = (pos < lengths).astype(jnp.float32)                       # (B, T)
    env_emb = jnp.sum(tok_emb_ref[...] * mask[:, :, None], axis=1)   # (B, H)
    env_emb = env_emb / jnp.maximum(lengths, 1.0)

    # --- single-step multi-layer LSTM (PyTorch gate order: i, f, g, o) ----
    # One fused [B, 2H] @ [2H, 4H] matmul per layer; gates split by static
    # lane slices of the 128-lane result.
    layer_in = inputs
    for l in range(L):
        h_prev = state_in_ref[:, l * 2 * H: l * 2 * H + H]
        c_prev = state_in_ref[:, l * 2 * H + H: (l + 1) * 2 * H]
        xh_ref[:, :H] = layer_in
        xh_ref[:, H:] = h_prev
        gates = (jnp.dot(xh_ref[...], w_lstm_ref[l],
                         preferred_element_type=jnp.float32)
                 + b_lstm_ref[l])                                    # (B, 4H)
        i_g = jax.nn.sigmoid(gates[:, 0 * H:1 * H])
        f_g = jax.nn.sigmoid(gates[:, 1 * H:2 * H])
        g_g = jnp.tanh(gates[:, 2 * H:3 * H])
        o_g = jax.nn.sigmoid(gates[:, 3 * H:4 * H])
        c_new = f_g * c_prev + i_g * g_g
        h_new = o_g * jnp.tanh(c_new)
        state_out_ref[:, l * 2 * H: l * 2 * H + H] = h_new
        state_out_ref[:, l * 2 * H + H: (l + 1) * 2 * H] = c_new
        layer_in = h_new

    # --- actor: Linear(3H -> A) over cat([lstm_out, env_emb, inputs]) -----
    cat_ref[:, 0 * H:1 * H] = layer_in
    cat_ref[:, 1 * H:2 * H] = env_emb
    cat_ref[:, 2 * H:3 * H] = inputs
    mean_ref[...] = (jnp.dot(cat_ref[...], w_act_ref[...],
                             preferred_element_type=jnp.float32)
                     + b_act_ref[...])


def lstm_bot_forward(params, obs, sketchs, sketch_lengths, mems):
    """Full forward. Returns (action_mean, next_mems)."""
    B = obs.shape[0]
    H = params["w_enc"].shape[1]
    L = params["w_lstm"].shape[0]
    A = params["b_act"].shape[1]

    # env_emb table gather stays in plain JAX (data-dependent gather);
    # masked mean pooling happens inside the kernel.
    # TODO(synk): `get_env_encoder(env_arch, hidden_size)` architecture is not
    # given; approximated as embedding lookup + masked mean pooling.
    tok_emb = params["env_emb_table"][sketchs]                       # [B, T, H]
    lengths = sketch_lengths.astype(jnp.float32).reshape(B, 1)

    # _unflat_mem equivalent: PyTorch interleaved (B, L, H, 2) flat layout ->
    # lane-dense block layout [h_l0 | c_l0 | h_l1 | c_l1 | ...] of shape
    # (B, 2*L*H). Single transpose of a tiny (8, 128) tile.
    state_in = mems.reshape(B, L, H, 2).transpose(0, 1, 3, 2).reshape(B, 2 * L * H)

    vmem = pl.BlockSpec(memory_space=pltpu.MemorySpace.VMEM)
    out_shapes = (
        jax.ShapeDtypeStruct((B, A), jnp.float32),            # action mean
        jax.ShapeDtypeStruct((B, 2 * L * H), jnp.float32),    # next state (block layout)
    )
    mean, state_out = pl.pallas_call(
        lstm_bot_kernel,
        out_shape=out_shapes,
        in_specs=[vmem] * 12,
        out_specs=(vmem, vmem),
        scratch_shapes=[pltpu.VMEM((B, 2 * H), jnp.float32),   # [x | h] pack
                        pltpu.VMEM((B, 3 * H), jnp.float32)],  # actor concat
    )(obs, params["s_mu"], params["s_std"],
      params["w_enc"], params["b_enc"],
      params["w_lstm"], params["b_lstm"],
      state_in, tok_emb, lengths,
      params["w_act"], params["b_act"])

    # _flat_mem equivalent: block layout -> PyTorch interleaved flat mems.
    next_mems = state_out.reshape(B, L, 2, H).transpose(0, 1, 3, 2).reshape(B, 2 * L * H)

    # TODO(synk): get_action_dist(mean) has no Pallas equivalent (distribution
    # object); we return the distribution mean, which is what get_action uses.
    return mean, next_mems


def lstm_bot_forward_ref(params, obs, sketchs, sketch_lengths, mems):
    """Pure-JAX reference for validation (same fused parameterization)."""
    B = obs.shape[0]
    H = params["w_enc"].shape[1]
    L = params["w_lstm"].shape[0]

    tok_emb = params["env_emb_table"][sketchs]
    T = sketchs.shape[1]
    mask = (jnp.arange(T)[None, :] < sketch_lengths[:, None]).astype(jnp.float32)
    env_emb = (tok_emb * mask[..., None]).sum(axis=1) / jnp.maximum(
        sketch_lengths.astype(jnp.float32), 1.0)[:, None]

    x = (obs - params["s_mu"]) / params["s_std"]
    x = x @ params["w_enc"] + params["b_enc"]
    mu = x.mean(-1, keepdims=True)
    var = ((x - mu) ** 2).mean(-1, keepdims=True)
    inputs = (x - mu) / jnp.sqrt(var + 1e-5)

    m = mems.reshape(B, L, H, 2).transpose(1, 0, 2, 3)
    h0, c0 = m[..., 0], m[..., 1]

    layer_in = inputs
    hs, cs = [], []
    for l in range(L):
        xh = jnp.concatenate([layer_in, h0[l]], axis=-1)
        gates = xh @ params["w_lstm"][l] + params["b_lstm"][l]
        i_g = jax.nn.sigmoid(gates[:, 0:H])
        f_g = jax.nn.sigmoid(gates[:, H:2 * H])
        g_g = jnp.tanh(gates[:, 2 * H:3 * H])
        o_g = jax.nn.sigmoid(gates[:, 3 * H:4 * H])
        c_new = f_g * c0[l] + i_g * g_g
        h_new = o_g * jnp.tanh(c_new)
        hs.append(h_new)
        cs.append(c_new)
        layer_in = h_new

    mean = (jnp.concatenate([layer_in, env_emb, inputs], axis=-1) @ params["w_act"]
            + params["b_act"])
    next_mems = jnp.stack([jnp.stack(hs), jnp.stack(cs)], axis=-1)
    next_mems = next_mems.transpose(1, 0, 2, 3).reshape(B, -1)
    return mean, next_mems


def init_params(key, input_dim, hidden_size, action_dim, num_layers, vocab_size):
    keys = jax.random.split(key, 8)
    H, A, L = hidden_size, action_dim, num_layers

    def unif(k, shape, scale):
        return jax.random.uniform(k, shape, jnp.float32, -scale, scale)

    params = {
        # Normaliser (dataloader stats)
        "s_mu": jnp.zeros((1, input_dim), jnp.float32),
        "s_std": jnp.ones((1, input_dim), jnp.float32),
        # inp_enc: Linear(input_dim -> H)
        "w_enc": unif(keys[0], (input_dim, H), 1.0 / jnp.sqrt(input_dim)),
        "b_enc": unif(keys[1], (1, H), 1.0 / jnp.sqrt(input_dim)),
        # Fused LSTM weights: rows 0:H act on x, rows H:2H act on h_prev;
        # columns are PyTorch gate order [i | f | g | o], each H wide.
        "w_lstm": unif(keys[2], (L, 2 * H, 4 * H), 1.0 / jnp.sqrt(H)),
        # b_ih + b_hh pre-summed into one per-layer bias.
        "b_lstm": (unif(keys[3], (L, 1, 4 * H), 1.0 / jnp.sqrt(H))
                   + unif(keys[4], (L, 1, 4 * H), 1.0 / jnp.sqrt(H))),
        # actor: Linear(3H -> A) over [lstm_out | env_emb | inputs]
        "w_act": unif(keys[5], (3 * H, A), 1.0 / jnp.sqrt(3 * H)),
        "b_act": unif(keys[6], (1, A), 1.0 / jnp.sqrt(3 * H)),
        # env encoder embedding table
        "env_emb_table": jax.random.normal(keys[7], (vocab_size, H), jnp.float32) * 0.1,
    }
    return params


if __name__ == "__main__":
    B, input_dim, H, A, L = 8, 16, 32, 8, 2
    task_len, vocab = 5, 11
    mem_size = 2 * L * H

    key = jax.random.PRNGKey(0)
    k_obs, k_sk, k_len, k_mem, k_par = jax.random.split(key, 5)

    params = init_params(k_par, input_dim, H, A, L, vocab)

    obs = jax.random.normal(k_obs, (B, input_dim), jnp.float32)
    sketchs = jax.random.randint(k_sk, (B, task_len), 0, vocab)
    sketch_lengths = jax.random.randint(k_len, (B,), 1, task_len + 1)
    mems = jax.random.normal(k_mem, (B, mem_size), jnp.float32) * 0.1

    mean, next_mems = jax.jit(lstm_bot_forward)(params, obs, sketchs,
                                                sketch_lengths, mems)
    jax.block_until_ready((mean, next_mems))

    mean_ref, next_mems_ref = lstm_bot_forward_ref(params, obs, sketchs,
                                                   sketch_lengths, mems)
    assert mean.shape == (B, A) and next_mems.shape == (B, mem_size)
    assert jnp.allclose(mean, mean_ref, atol=1e-4, rtol=1e-4)
    assert jnp.allclose(next_mems, next_mems_ref, atol=1e-4, rtol=1e-4)
    print("KERNEL_OK")
</pallas_src>

<mosaic_0001>
module attributes {stable_mosaic.version = 11 : i64} {
  func.func @lstm_bot_kernel(%arg0: memref<8x16xf32, #tpu.memory_space<vmem>>, %arg1: memref<1x16xf32, #tpu.memory_space<vmem>>, %arg2: memref<1x16xf32, #tpu.memory_space<vmem>>, %arg3: memref<16x32xf32, #tpu.memory_space<vmem>>, %arg4: memref<1x32xf32, #tpu.memory_space<vmem>>, %arg5: memref<2x64x128xf32, #tpu.memory_space<vmem>>, %arg6: memref<2x1x128xf32, #tpu.memory_space<vmem>>, %arg7: memref<8x128xf32, #tpu.memory_space<vmem>>, %arg8: memref<8x5x32xf32, #tpu.memory_space<vmem>>, %arg9: memref<8x1xf32, #tpu.memory_space<vmem>>, %arg10: memref<96x8xf32, #tpu.memory_space<vmem>>, %arg11: memref<1x8xf32, #tpu.memory_space<vmem>>, %arg12: memref<8x8xf32, #tpu.memory_space<vmem>>, %arg13: memref<8x128xf32, #tpu.memory_space<vmem>>, %arg14: memref<8x64xf32, #tpu.memory_space<vmem>>, %arg15: memref<8x96xf32, #tpu.memory_space<vmem>>) attributes {dimension_semantics = [], scalar_prefetch = 0 : i64, scratch_operands = 2 : i64, tpu.core_type = #tpu.core_type<tc>} {
    %c0 = arith.constant 0 : index
    %c0_0 = arith.constant 0 : index
    %0 = vector.load %arg0[%c0, %c0_0] : memref<8x16xf32, #tpu.memory_space<vmem>>, vector<8x16xf32>
    %c0_1 = arith.constant 0 : index
    %c0_2 = arith.constant 0 : index
    %1 = vector.load %arg1[%c0_1, %c0_2] : memref<1x16xf32, #tpu.memory_space<vmem>>, vector<1x16xf32>
    %2 = vector.broadcast %1 : vector<1x16xf32> to vector<8x16xf32>
    %3 = arith.subf %0, %2 : vector<8x16xf32>
    %c0_3 = arith.constant 0 : index
    %c0_4 = arith.constant 0 : index
    %4 = vector.load %arg2[%c0_3, %c0_4] : memref<1x16xf32, #tpu.memory_space<vmem>>, vector<1x16xf32>
    %5 = vector.broadcast %4 : vector<1x16xf32> to vector<8x16xf32>
    %6 = arith.divf %3, %5 : vector<8x16xf32>
    %c0_5 = arith.constant 0 : index
    %c0_6 = arith.constant 0 : index
    %7 = vector.load %arg3[%c0_5, %c0_6] : memref<16x32xf32, #tpu.memory_space<vmem>>, vector<16x32xf32>
    %cst = arith.constant dense<0.000000e+00> : vector<8x32xf32>
    %8 = tpu.matmul %6, %7, %cst {dimension_numbers = #tpu.dot_dimension_numbers<[1], [0], [0], [1], [0, 0, 1, 1], [], []>} : vector<8x16xf32>, vector<16x32xf32>, vector<8x32xf32> -> vector<8x32xf32>
    %c0_7 = arith.constant 0 : index
    %c0_8 = arith.constant 0 : index
    %9 = vector.load %arg4[%c0_7, %c0_8] : memref<1x32xf32, #tpu.memory_space<vmem>>, vector<1x32xf32>
    %10 = vector.broadcast %9 : vector<1x32xf32> to vector<8x32xf32>
    %11 = arith.addf %8, %10 : vector<8x32xf32>
    %cst_9 = arith.constant dense<0.000000e+00> : vector<8xf32>
    %12 = vector.multi_reduction <add>, %11, %cst_9 [1] : vector<8x32xf32> to vector<8xf32>
    %13 = vector.shape_cast %12 : vector<8xf32> to vector<8x1xf32>
    %cst_10 = arith.constant 3.200000e+01 : f32
    %14 = vector.broadcast %cst_10 : f32 to vector<8x1xf32>
    %15 = arith.divf %13, %14 : vector<8x1xf32>
    %16 = vector.broadcast %15 : vector<8x1xf32> to vector<8x32xf32>
    %17 = arith.subf %11, %16 : vector<8x32xf32>
    %18 = arith.mulf %17, %17 : vector<8x32xf32>
    %cst_11 = arith.constant dense<0.000000e+00> : vector<8xf32>
    %19 = vector.multi_reduction <add>, %18, %cst_11 [1] : vector<8x32xf32> to vector<8xf32>
    %20 = vector.shape_cast %19 : vector<8xf32> to vector<8x1xf32>
    %cst_12 = arith.constant 3.200000e+01 : f32
    %21 = vector.broadcast %cst_12 : f32 to vector<8x1xf32>
    %22 = arith.divf %20, %21 : vector<8x1xf32>
    %23 = vector.broadcast %15 : vector<8x1xf32> to vector<8x32xf32>
    %24 = arith.subf %11, %23 : vector<8x32xf32>
    %cst_13 = arith.constant 9.99999974E-6 : f32
    %25 = vector.broadcast %cst_13 : f32 to vector<8x1xf32>
    %26 = arith.addf %22, %25 : vector<8x1xf32>
    %27 = math.rsqrt %26 : vector<8x1xf32>
    %28 = vector.broadcast %27 : vector<8x1xf32> to vector<8x32xf32>
    %29 = arith.mulf %24, %28 : vector<8x32xf32>
    %c0_14 = arith.constant 0 : index
    %c0_15 = arith.constant 0 : index
    %30 = vector.load %arg9[%c0_14, %c0_15] : memref<8x1xf32, #tpu.memory_space<vmem>>, vector<8x1xf32>
    %31 = tpu.iota {dimensions = array<i32: 1>} : vector<8x5xi32>
    %32 = arith.sitofp %31 : vector<8x5xi32> to vector<8x5xf32>
    %33 = vector.broadcast %30 : vector<8x1xf32> to vector<8x5xf32>
    %34 = arith.cmpf olt, %32, %33 : vector<8x5xf32>
    %35 = arith.extui %34 : vector<8x5xi1> to vector<8x5xi32>
    %36 = arith.sitofp %35 : vector<8x5xi32> to vector<8x5xf32>
    %c0_16 = arith.constant 0 : index
    %c0_17 = arith.constant 0 : index
    %c0_18 = arith.constant 0 : index
    %37 = vector.load %arg8[%c0_16, %c0_17, %c0_18] : memref<8x5x32xf32, #tpu.memory_space<vmem>>, vector<8x5x32xf32>
    %38 = vector.shape_cast %36 : vector<8x5xf32> to vector<8x5x1xf32>
    %39 = vector.broadcast %38 : vector<8x5x1xf32> to vector<8x5x32xf32>
    %40 = arith.mulf %37, %39 : vector<8x5x32xf32>
    %cst_19 = arith.constant dense<0.000000e+00> : vector<8x32xf32>
    %41 = vector.multi_reduction <add>, %40, %cst_19 [1] : vector<8x5x32xf32> to vector<8x32xf32>
    %cst_20 = arith.constant 1.000000e+00 : f32
    %42 = vector.broadcast %cst_20 : f32 to vector<8x1xf32>
    %43 = arith.maximumf %30, %42 : vector<8x1xf32>
    %44 = vector.broadcast %43 : vector<8x1xf32> to vector<8x32xf32>
    %45 = arith.divf %41, %44 : vector<8x32xf32>
    %c0_21 = arith.constant 0 : index
    %c0_22 = arith.constant 0 : index
    %46 = vector.load %arg7[%c0_21, %c0_22] : memref<8x128xf32, #tpu.memory_space<vmem>>, vector<8x32xf32>
    %c0_23 = arith.constant 0 : index
    %c32 = arith.constant 32 : index
    %47 = vector.load %arg7[%c0_23, %c32] : memref<8x128xf32, #tpu.memory_space<vmem>>, vector<8x32xf32>
    %c0_24 = arith.constant 0 : index
    %c0_25 = arith.constant 0 : index
    %48 = vector.load %arg14[%c0_24, %c0_25] : memref<8x64xf32, #tpu.memory_space<vmem>>, vector<8x32xf32>
    tpu.vector_store %arg14[%c0_24, %c0_25], %29 {strides = array<i32>} : memref<8x64xf32, #tpu.memory_space<vmem>>, vector<8x32xf32>,
    %c0_26 = arith.constant 0 : index
    %c32_27 = arith.constant 32 : index
    %49 = vector.load %arg14[%c0_26, %c32_27] : memref<8x64xf32, #tpu.memory_space<vmem>>, vector<8x32xf32>
    tpu.vector_store %arg14[%c0_26, %c32_27], %46 {strides = array<i32>} : memref<8x64xf32, #tpu.memory_space<vmem>>, vector<8x32xf32>,
    %c0_28 = arith.constant 0 : index
    %c0_29 = arith.constant 0 : index
    %50 = vector.load %arg14[%c0_28, %c0_29] : memref<8x64xf32, #tpu.memory_space<vmem>>, vector<8x64xf32>
    %c0_30 = arith.constant 0 : index
    %c0_31 = arith.constant 0 : index
    %c0_32 = arith.constant 0 : index
    %51 = vector.load %arg5[%c0_30, %c0_31, %c0_32] : memref<2x64x128xf32, #tpu.memory_space<vmem>>, vector<1x64x128xf32>
    %52 = vector.shape_cast %51 : vector<1x64x128xf32> to vector<64x128xf32>
    %cst_33 = arith.constant dense<0.000000e+00> : vector<8x128xf32>
    %53 = tpu.matmul %50, %52, %cst_33 {dimension_numbers = #tpu.dot_dimension_numbers<[1], [0], [0], [1], [0, 0, 1, 1], [], []>} : vector<8x64xf32>, vector<64x128xf32>, vector<8x128xf32> -> vector<8x128xf32>
    %c0_34 = arith.constant 0 : index
    %c0_35 = arith.constant 0 : index
    %c0_36 = arith.constant 0 : index
    %54 = vector.load %arg6[%c0_34, %c0_35, %c0_36] : memref<2x1x128xf32, #tpu.memory_space<vmem>>, vector<1x1x128xf32>
    %55 = vector.shape_cast %54 : vector<1x1x128xf32> to vector<1x128xf32>
    %56 = vector.broadcast %55 : vector<1x128xf32> to vector<8x128xf32>
    %57 = arith.addf %53, %56 : vector<8x128xf32>
    %58 = vector.extract_strided_slice %57 {offsets = [0, 0], sizes = [8, 32], strides = [1, 1]} : vector<8x128xf32> to vector<8x32xf32>
    %59 = arith.negf %58 : vector<8x32xf32>
    %60 = math.exp %59 : vector<8x32xf32>
    %cst_37 = arith.constant 1.000000e+00 : f32
    %61 = vector.broadcast %cst_37 : f32 to vector<8x32xf32>
    %62 = arith.addf %61, %60 : vector<8x32xf32>
    %63 = arith.divf %61, %62 : vector<8x32xf32>
    %64 = vector.extract_strided_slice %57 {offsets = [0, 32], sizes = [8, 32], strides = [1, 1]} : vector<8x128xf32> to vector<8x32xf32>
    %65 = arith.negf %64 : vector<8x32xf32>
    %66 = math.exp %65 : vector<8x32xf32>
    %cst_38 = arith.constant 1.000000e+00 : f32
    %67 = vector.broadcast %cst_38 : f32 to vector<8x32xf32>
    %68 = arith.addf %67, %66 : vector<8x32xf32>
    %69 = arith.divf %67, %68 : vector<8x32xf32>
    %70 = vector.extract_strided_slice %57 {offsets = [0, 64], sizes = [8, 32], strides = [1, 1]} : vector<8x128xf32> to vector<8x32xf32>
    %71 = math.tanh %70 : vector<8x32xf32>
    %72 = vector.extract_strided_slice %57 {offsets = [0, 96], sizes = [8, 32], strides = [1, 1]} : vector<8x128xf32> to vector<8x32xf32>
    %73 = arith.negf %72 : vector<8x32xf32>
    %74 = math.exp %73 : vector<8x32xf32>
    %cst_39 = arith.constant 1.000000e+00 : f32
    %75 = vector.broadcast %cst_39 : f32 to vector<8x32xf32>
    %76 = arith.addf %75, %74 : vector<8x32xf32>
    %77 = arith.divf %75, %76 : vector<8x32xf32>
    %78 = arith.mulf %69, %47 : vector<8x32xf32>
    %79 = arith.mulf %63, %71 : vector<8x32xf32>
    %80 = arith.addf %78, %79 : vector<8x32xf32>
    %81 = math.tanh %80 : vector<8x32xf32>
    %82 = arith.mulf %77, %81 : vector<8x32xf32>
    %c0_40 = arith.constant 0 : index
    %c0_41 = arith.constant 0 : index
    %83 = vector.load %arg13[%c0_40, %c0_41] : memref<8x128xf32, #tpu.memory_space<vmem>>, vector<8x32xf32>
    tpu.vector_store %arg13[%c0_40, %c0_41], %82 {strides = array<i32>} : memref<8x128xf32, #tpu.memory_space<vmem>>, vector<8x32xf32>,
    %c0_42 = arith.constant 0 : index
    %c32_43 = arith.constant 32 : index
    %84 = vector.load %arg13[%c0_42, %c32_43] : memref<8x128xf32, #tpu.memory_space<vmem>>, vector<8x32xf32>
    tpu.vector_store %arg13[%c0_42, %c32_43], %80 {strides = array<i32>} : memref<8x128xf32, #tpu.memory_space<vmem>>, vector<8x32xf32>,
    %c0_44 = arith.constant 0 : index
    %c64 = arith.constant 64 : index
    %85 = vector.load %arg7[%c0_44, %c64] : memref<8x128xf32, #tpu.memory_space<vmem>>, vector<8x32xf32>
    %c0_45 = arith.constant 0 : index
    %c96 = arith.constant 96 : index
    %86 = vector.load %arg7[%c0_45, %c96] : memref<8x128xf32, #tpu.memory_space<vmem>>, vector<8x32xf32>
    %c0_46 = arith.constant 0 : index
    %c0_47 = arith.constant 0 : index
    %87 = vector.load %arg14[%c0_46, %c0_47] : memref<8x64xf32, #tpu.memory_space<vmem>>, vector<8x32xf32>
    tpu.vector_store %arg14[%c0_46, %c0_47], %82 {strides = array<i32>} : memref<8x64xf32, #tpu.memory_space<vmem>>, vector<8x32xf32>,
    %c0_48 = arith.constant 0 : index
    %c32_49 = arith.constant 32 : index
    %88 = vector.load %arg14[%c0_48, %c32_49] : memref<8x64xf32, #tpu.memory_space<vmem>>, vector<8x32xf32>
    tpu.vector_store %arg14[%c0_48, %c32_49], %85 {strides = array<i32>} : memref<8x64xf32, #tpu.memory_space<vmem>>, vector<8x32xf32>,
    %c0_50 = arith.constant 0 : index
    %c0_51 = arith.constant 0 : index
    %89 = vector.load %arg14[%c0_50, %c0_51] : memref<8x64xf32, #tpu.memory_space<vmem>>, vector<8x64xf32>
    %c1 = arith.constant 1 : index
    %c0_52 = arith.constant 0 : index
    %c0_53 = arith.constant 0 : index
    %90 = vector.load %arg5[%c1, %c0_52, %c0_53] : memref<2x64x128xf32, #tpu.memory_space<vmem>>, vector<1x64x128xf32>
    %91 = vector.shape_cast %90 : vector<1x64x128xf32> to vector<64x128xf32>
    %cst_54 = arith.constant dense<0.000000e+00> : vector<8x128xf32>
    %92 = tpu.matmul %89, %91, %cst_54 {dimension_numbers = #tpu.dot_dimension_numbers<[1], [0], [0], [1], [0, 0, 1, 1], [], []>} : vector<8x64xf32>, vector<64x128xf32>, vector<8x128xf32> -> vector<8x128xf32>
    %c1_55 = arith.constant 1 : index
    %c0_56 = arith.constant 0 : index
    %c0_57 = arith.constant 0 : index
    %93 = vector.load %arg6[%c1_55, %c0_56, %c0_57] : memref<2x1x128xf32, #tpu.memory_space<vmem>>, vector<1x1x128xf32>
    %94 = vector.shape_cast %93 : vector<1x1x128xf32> to vector<1x128xf32>
    %95 = vector.broadcast %94 : vector<1x128xf32> to vector<8x128xf32>
    %96 = arith.addf %92, %95 : vector<8x128xf32>
    %97 = vector.extract_strided_slice %96 {offsets = [0, 0], sizes = [8, 32], strides = [1, 1]} : vector<8x128xf32> to vector<8x32xf32>
    %98 = arith.negf %97 : vector<8x32xf32>
    %99 = math.exp %98 : vector<8x32xf32>
    %cst_58 = arith.constant 1.000000e+00 : f32
    %100 = vector.broadcast %cst_58 : f32 to vector<8x32xf32>
    %101 = arith.addf %100, %99 : vector<8x32xf32>
    %102 = arith.divf %100, %101 : vector<8x32xf32>
    %103 = vector.extract_strided_slice %96 {offsets = [0, 32], sizes = [8, 32], strides = [1, 1]} : vector<8x128xf32> to vector<8x32xf32>
    %104 = arith.negf %103 : vector<8x32xf32>
    %105 = math.exp %104 : vector<8x32xf32>
    %cst_59 = arith.constant 1.000000e+00 : f32
    %106 = vector.broadcast %cst_59 : f32 to vector<8x32xf32>
    %107 = arith.addf %106, %105 : vector<8x32xf32>
    %108 = arith.divf %106, %107 : vector<8x32xf32>
    %109 = vector.extract_strided_slice %96 {offsets = [0, 64], sizes = [8, 32], strides = [1, 1]} : vector<8x128xf32> to vector<8x32xf32>
    %110 = math.tanh %109 : vector<8x32xf32>
    %111 = vector.extract_strided_slice %96 {offsets = [0, 96], sizes = [8, 32], strides = [1, 1]} : vector<8x128xf32> to vector<8x32xf32>
    %112 = arith.negf %111 : vector<8x32xf32>
    %113 = math.exp %112 : vector<8x32xf32>
    %cst_60 = arith.constant 1.000000e+00 : f32
    %114 = vector.broadcast %cst_60 : f32 to vector<8x32xf32>
    %115 = arith.addf %114, %113 : vector<8x32xf32>
    %116 = arith.divf %114, %115 : vector<8x32xf32>
    %117 = arith.mulf %108, %86 : vector<8x32xf32>
    %118 = arith.mulf %102, %110 : vector<8x32xf32>
    %119 = arith.addf %117, %118 : vector<8x32xf32>
    %120 = math.tanh %119 : vector<8x32xf32>
    %121 = arith.mulf %116, %120 : vector<8x32xf32>
    %c0_61 = arith.constant 0 : index
    %c64_62 = arith.constant 64 : index
    %122 = vector.load %arg13[%c0_61, %c64_62] : memref<8x128xf32, #tpu.memory_space<vmem>>, vector<8x32xf32>
    tpu.vector_store %arg13[%c0_61, %c64_62], %121 {strides = array<i32>} : memref<8x128xf32, #tpu.memory_space<vmem>>, vector<8x32xf32>,
    %c0_63 = arith.constant 0 : index
    %c96_64 = arith.constant 96 : index
    %123 = vector.load %arg13[%c0_63, %c96_64] : memref<8x128xf32, #tpu.memory_space<vmem>>, vector<8x32xf32>
    tpu.vector_store %arg13[%c0_63, %c96_64], %119 {strides = array<i32>} : memref<8x128xf32, #tpu.memory_space<vmem>>, vector<8x32xf32>,
    %c0_65 = arith.constant 0 : index
    %c0_66 = arith.constant 0 : index
    %124 = vector.load %arg15[%c0_65, %c0_66] : memref<8x96xf32, #tpu.memory_space<vmem>>, vector<8x32xf32>
    tpu.vector_store %arg15[%c0_65, %c0_66], %121 {strides = array<i32>} : memref<8x96xf32, #tpu.memory_space<vmem>>, vector<8x32xf32>,
    %c0_67 = arith.constant 0 : index
    %c32_68 = arith.constant 32 : index
    %125 = vector.load %arg15[%c0_67, %c32_68] : memref<8x96xf32, #tpu.memory_space<vmem>>, vector<8x32xf32>
    tpu.vector_store %arg15[%c0_67, %c32_68], %45 {strides = array<i32>} : memref<8x96xf32, #tpu.memory_space<vmem>>, vector<8x32xf32>,
    %c0_69 = arith.constant 0 : index
    %c64_70 = arith.constant 64 : index
    %126 = vector.load %arg15[%c0_69, %c64_70] : memref<8x96xf32, #tpu.memory_space<vmem>>, vector<8x32xf32>
    tpu.vector_store %arg15[%c0_69, %c64_70], %29 {strides = array<i32>} : memref<8x96xf32, #tpu.memory_space<vmem>>, vector<8x32xf32>,
    %c0_71 = arith.constant 0 : index
    %c0_72 = arith.constant 0 : index
    %127 = vector.load %arg15[%c0_71, %c0_72] : memref<8x96xf32, #tpu.memory_space<vmem>>, vector<8x96xf32>
    %c0_73 = arith.constant 0 : index
    %c0_74 = arith.constant 0 : index
    %128 = vector.load %arg10[%c0_73, %c0_74] : memref<96x8xf32, #tpu.memory_space<vmem>>, vector<96x8xf32>
    %cst_75 = arith.constant dense<0.000000e+00> : vector<8x8xf32>
    %129 = tpu.matmul %127, %128, %cst_75 {dimension_numbers = #tpu.dot_dimension_numbers<[1], [0], [0], [1], [0, 0, 1, 1], [], []>} : vector<8x96xf32>, vector<96x8xf32>, vector<8x8xf32> -> vector<8x8xf32>
    %c0_76 = arith.constant 0 : index
    %c0_77 = arith.constant 0 : index
    %130 = vector.load %arg11[%c0_76, %c0_77] : memref<1x8xf32, #tpu.memory_space<vmem>>, vector<1x8xf32>
    %131 = vector.broadcast %130 : vector<1x8xf32> to vector<8x8xf32>
    %132 = arith.addf %129, %131 : vector<8x8xf32>
    %c0_78 = arith.constant 0 : index
    %c0_79 = arith.constant 0 : index
    %133 = vector.load %arg12[%c0_78, %c0_79] : memref<8x8xf32, #tpu.memory_space<vmem>>, vector<8x8xf32>
    tpu.vector_store %arg12[%c0_78, %c0_79], %132 {strides = array<i32>} : memref<8x8xf32, #tpu.memory_space<vmem>>, vector<8x8xf32>,
    return
  }
}

</mosaic_0001>

<llo_original>
// kernel: lstm_bot_forward.1
$region0: #{lstm_bot_forward.1}
  #allocation0 [shape = 'u32[]', space=smem, size = 0x4, offset = 0x4, fixed_abs, tag = 'smem constant byte address 0x4 - core index']
  #allocation1 [shape = 'u32[144,128]{1,0:T(1,128)}', space=vmem, size = 0x12000, scoped, tag = 'internal scratch']
  #allocation2 [shape = 'f32[8,64]{1,0:T(8,128)}', space=vmem, size = 0x1000, scoped, tag = 'scratch operand']
  #allocation3 [shape = 'f32[8,96]{1,0:T(8,128)}', space=vmem, size = 0x1000, scoped, tag = 'scratch operand']
  %s0 = inlined_call_operand.vmem [shape: f32[8,16], index: 0, kind: input, shape index: {}]
  %s1 = inlined_call_operand.vmem [shape: f32[1,16], index: 1, kind: input, shape index: {}]
  %s2 = inlined_call_operand.vmem [shape: f32[1,16], index: 2, kind: input, shape index: {}]
  %s3 = inlined_call_operand.vmem [shape: f32[16,32], index: 3, kind: input, shape index: {}]
  %s4 = inlined_call_operand.vmem [shape: f32[1,32], index: 4, kind: input, shape index: {}]
  %s5 = inlined_call_operand.vmem [shape: f32[2,64,128], index: 5, kind: input, shape index: {}]
  %s6 = inlined_call_operand.vmem [shape: f32[2,1,128], index: 6, kind: input, shape index: {}]
  %s7 = inlined_call_operand.vmem [shape: f32[8,128], index: 7, kind: input, shape index: {}]
  %s8 = inlined_call_operand.vmem [shape: f32[8,5,32], index: 8, kind: input, shape index: {}]
  %s9 = inlined_call_operand.vmem [shape: f32[8,1], index: 9, kind: input, shape index: {}]
  %s10 = inlined_call_operand.vmem [shape: f32[96,8], index: 10, kind: input, shape index: {}]
  %s11 = inlined_call_operand.vmem [shape: f32[1,8], index: 11, kind: input, shape index: {}]
  %s12 = inlined_call_operand.hbm [shape: f32[8,8], index: 12, kind: output, shape index: {0}]
  %s13 = inlined_call_operand.vmem [shape: f32[8,128], index: 13, kind: output, shape index: {1}]
  %14 = xla_tuple %s12, %s13
  %s15 = sld [smem:[#allocation0]]
  $region66: #{lstm_bot_forward.1} parent=0
    _
  %s17 = ssub.s32 1, %s15
  %s18 = scalar_select 0, %s17, %s15
  $region1: #{lstm_bot_forward.1} parent=0
    #allocation4 [shape = 'u8[4096]{0}', space=vmem, size = 0x1000, scoped, tag = 'output window, operand 0, single buffered']
    #allocation5 [shape = 's32[1]{0}', space=sflag, size = 0x4, scoped, tag = 'scoped memory for lstm_bot_forward.1']
    %19 = vsyncpa [#allocation5], 0
    // Predicated region
    $region2: #{lstm_bot_forward.1} parent=1 // pred_check
      _
    $region3: #{lstm_bot_forward.1} parent=1 // pred_check_branch
      %21 = sbr.rel (0) target = $region5
    $region4: #{lstm_bot_forward.1} parent=1 // pred_region
      _
    $region5: #{lstm_bot_forward.1} parent=1 // pred_fallthru
      _
    // Predicated region
    $region6: #{lstm_bot_forward.1} parent=1 // pred_check
      _
    $region7: #{lstm_bot_forward.1} parent=1 // pred_check_branch
      %23 = sbr.rel (0) target = $region9
    $region8: #{lstm_bot_forward.1} parent=1 // pred_region
      _
    $region9: #{lstm_bot_forward.1} parent=1 // pred_fallthru
      _
    // Predicated region
    $region10: #{lstm_bot_forward.1} parent=1 // pred_check
      _
    $region11: #{lstm_bot_forward.1} parent=1 // pred_check_branch
      %25 = sbr.rel (0) target = $region13
    $region12: #{lstm_bot_forward.1} parent=1 // pred_region
      _
    $region13: #{lstm_bot_forward.1} parent=1 // pred_fallthru
      _
    // Predicated region
    $region14: #{lstm_bot_forward.1} parent=1 // pred_check
      _
    $region15: #{lstm_bot_forward.1} parent=1 // pred_check_branch
      %27 = sbr.rel (0) target = $region17
    $region16: #{lstm_bot_forward.1} parent=1 // pred_region
      _
    $region17: #{lstm_bot_forward.1} parent=1 // pred_fallthru
      _
    // Predicated region
    $region18: #{lstm_bot_forward.1} parent=1 // pred_check
      _
    $region19: #{lstm_bot_forward.1} parent=1 // pred_check_branch
      %29 = sbr.rel (0) target = $region21
    $region20: #{lstm_bot_forward.1} parent=1 // pred_region
      _
    $region21: #{lstm_bot_forward.1} parent=1 // pred_fallthru
      _
    // Predicated region
    $region22: #{lstm_bot_forward.1} parent=1 // pred_check
      _
    $region23: #{lstm_bot_forward.1} parent=1 // pred_check_branch
      %31 = sbr.rel (0) target = $region25
    $region24: #{lstm_bot_forward.1} parent=1 // pred_region
      _
    $region25: #{lstm_bot_forward.1} parent=1 // pred_fallthru
      _
    // Predicated region
    $region26: #{lstm_bot_forward.1} parent=1 // pred_check
      _
    $region27: #{lstm_bot_forward.1} parent=1 // pred_check_branch
      %33 = sbr.rel (0) target = $region29
    $region28: #{lstm_bot_forward.1} parent=1 // pred_region
      _
    $region29: #{lstm_bot_forward.1} parent=1 // pred_fallthru
      _
    // Predicated region
    $region30: #{lstm_bot_forward.1} parent=1 // pred_check
      _
    $region31: #{lstm_bot_forward.1} parent=1 // pred_check_branch
      %35 = sbr.rel (0) target = $region33
    $region32: #{lstm_bot_forward.1} parent=1 // pred_region
      _
    $region33: #{lstm_bot_forward.1} parent=1 // pred_fallthru
      _
    // Predicated region
    $region34: #{lstm_bot_forward.1} parent=1 // pred_check
      _
    $region35: #{lstm_bot_forward.1} parent=1 // pred_check_branch
      %37 = sbr.rel (0) target = $region37
    $region36: #{lstm_bot_forward.1} parent=1 // pred_region
      _
    $region37: #{lstm_bot_forward.1} parent=1 // pred_fallthru
      _
    // Predicated region
    $region38: #{lstm_bot_forward.1} parent=1 // pred_check
      _
    $region39: #{lstm_bot_forward.1} parent=1 // pred_check_branch
      %39 = sbr.rel (0) target = $region41
    $region40: #{lstm_bot_forward.1} parent=1 // pred_region
      _
    $region41: #{lstm_bot_forward.1} parent=1 // pred_fallthru
      _
    // Predicated region
    $region42: #{lstm_bot_forward.1} parent=1 // pred_check
      _
    $region43: #{lstm_bot_forward.1} parent=1 // pred_check_branch
      %41 = sbr.rel (0) target = $region45
    $region44: #{lstm_bot_forward.1} parent=1 // pred_region
      _
    $region45: #{lstm_bot_forward.1} parent=1 // pred_fallthru
      _
    // Predicated region
    $region46: #{lstm_bot_forward.1} parent=1 // pred_check
      _
    $region47: #{lstm_bot_forward.1} parent=1 // pred_check_branch
      %43 = sbr.rel (0) target = $region49
    $region48: #{lstm_bot_forward.1} parent=1 // pred_region
      _
    $region49: #{lstm_bot_forward.1} parent=1 // pred_fallthru
      _
    %v44 = vld [vmem:[%s0] sm:$0xff]
    %v45 = vld [vmem:[%s1] sm:$0x1]
    %v47 = vlaneseq
    %v48 = vshrl.u32 %v47, 7
    %v49 = vsub.s32 0, %v48
    %v50 = vrot.slane %v45, %v49
    %v52 = vsub.f32 %v44, %v50
    %v53 = vld [vmem:[%s2] sm:$0x1]
    %v55 = vlaneseq
    %v56 = vshrl.u32 %v55, 7
    %v57 = vsub.s32 0, %v56
    %v58 = vrot.slane %v53, %v57
    %v60 = vrcp.pop %v58
    %v61 = vmul.f32 %v52, %v60
    %v62 = vld [vmem:[%s3] sm:$0xff]
    %v63 = vld [vmem:[%s3 + $0x8] sm:$0xff]
    %v64 = vld [vmem:[%s4] sm:$0x1]
    %v66 = vlaneseq
    %v67 = vshrl.u32 %v66, 7
    %v68 = vsub.s32 0, %v67
    %v69 = vrot.slane %v64, %v68
    %vm71 = vcmask 130048
    %v73 = vsel %vm71, %v61, 0
    %75 = vmatprep.subr.mxu0 0.0
    %76 = vmatpush1.msra.mxu0 0.0
    %77 = vmatprep.subr.mxu0 0.0
    %78 = vmatpush1.msra.mxu0 0.0
    %79 = vmatprep.subr.mxu0 0.0
    %80 = vmatpush1.msra.mxu0 0.0
    %81 = vmatprep.subr.mxu0 0.0
    %82 = vmatpush1.msra.mxu0 0.0
    %83 = vmatprep.subr.mxu0 0.0
    %84 = vmatpush1.msra.mxu0 0.0
    %85 = vmatprep.subr.mxu0 0.0
    %86 = vmatpush1.msra.mxu0 0.0
    %87 = vmatprep.subr.mxu0 0.0
    %88 = vmatpush1.msra.mxu0 0.0
    %89 = vmatprep.subr.mxu0 0.0
    %90 = vmatpush1.msra.mxu0 0.0
    %91 = vmatprep.subr.mxu0 0.0
    %92 = vmatpush1.msra.mxu0 0.0
    %93 = vmatprep.subr.mxu0 0.0
    %94 = vmatpush1.msra.mxu0 0.0
    %95 = vmatprep.subr.mxu0 0.0
    %96 = vmatpush1.msra.mxu0 0.0
    %97 = vmatprep.subr.mxu0 0.0
    %98 = vmatpush1.msra.mxu0 0.0
    %99 = vmatprep.subr.mxu0 0.0
    %100 = vmatpush1.msra.mxu0 0.0
    %101 = vmatprep.subr.mxu0 0.0
    %102 = vmatpush1.msra.mxu0 0.0
    %103 = vmatprep.subr.mxu0 0.0
    %104 = vmatpush1.msra.mxu0 %v63
    %105 = vmatprep.subr.mxu0 0.0
    %106 = vmatpush1.msra.mxu0 %v62
    %107 = vmatprep.subr.mxu0 0.0
    %108 = vmatpush2.msra.mxu0 0.0
    %109 = vmatprep.subr.mxu0 0.0
    %110 = vmatpush2.msra.mxu0 0.0
    %111 = vmatprep.subr.mxu0 0.0
    %112 = vmatpush2.msra.mxu0 0.0
    %113 = vmatprep.subr.mxu0 0.0
    %114 = vmatpush2.msra.mxu0 0.0
    %115 = vmatprep.subr.mxu0 0.0
    %116 = vmatpush2.msra.mxu0 0.0
    %117 = vmatprep.subr.mxu0 0.0
    %118 = vmatpush2.msra.mxu0 0.0
    %119 = vmatprep.subr.mxu0 0.0
    %120 = vmatpush2.msra.mxu0 0.0
    %121 = vmatprep.subr.mxu0 0.0
    %122 = vmatpush2.msra.mxu0 0.0
    %123 = vmatprep.subr.mxu0 0.0
    %124 = vmatpush2.msra.mxu0 0.0
    %125 = vmatprep.subr.mxu0 0.0
    %126 = vmatpush2.msra.mxu0 0.0
    %127 = vmatprep.subr.mxu0 0.0
    %128 = vmatpush2.msra.mxu0 0.0
    %129 = vmatprep.subr.mxu0 0.0
    %130 = vmatpush2.msra.mxu0 0.0
    %131 = vmatprep.subr.mxu0 0.0
    %132 = vmatpush2.msra.mxu0 0.0
    %133 = vmatprep.subr.mxu0 0.0
    %134 = vmatpush2.msra.mxu0 0.0
    %135 = vmatprep.subr.mxu0 0.0
    %136 = vmatpush2.msra.mxu0 0.0
    %137 = vmatprep.subr.mxu0 0.0
    %138 = vmatpush2.msra.mxu0 0.0
    %139 = vmatprep.mubr.f32.mxu0 0.0
    %140 = vmatmul.mubr.f32.gmra.mxu0 %v73
    %v141 = vpop.f32.mrf.mxu0
    %v142 = vadd.f32 %v69, %v141
    %v143 = vpop.f32.mrf.mxu0
    %144 = vdwg.mxu0
    %vm145 = vcmask 261120
    %v146 = vsel %vm145, %v142, 0.0
    %147 = vadd.xlane.f32.xlu0 %v146
    %v148 = vpop.xlane.xlu0 %147
    %v149 = vrcp.pop 32.0
    %v150 = vmul.f32 %v148, %v149
    %v151 = vsub.f32 %v142, %v150
    %v152 = vmul.f32 %v151, %v151
    %v153 = vsel %vm145, %v152, 0.0
    %154 = vadd.xlane.f32.xlu0 %v153
    %v155 = vpop.xlane.xlu0 %154
    %v156 = vmul.f32 %v155, %v149
    %v157 = vadd.f32 %v156, 1e-05
    %v158 = vrsqrt.pop %v157
    %v159 = vmul.f32 %v151, %v158
    %v160 = vld [vmem:[%s9] sm:$0xff]
    %v161 = vlaneseq
    %v162 = vand.u32 %v161, 127
    %v163 = vcvt.s32.f32 %v162
    %165 = vset.pattern.permute.xlu0 0
    %166 = vperm.xlu0 %165, %v160
    %v167 = vpop.permute.xlu0 %166
    %vm169 = vcmp.lt.f32.partialorder %v163, %v167
    %v170 = vsel %vm169, 1, 0
    %v171 = vcvt.s32.f32 %v170
    %v172 = vld [vmem:[%s8] sm:$0x1f]
    %v173 = vld [vmem:[%s8 + $0x8] sm:$0x1f]
    %v174 = vld [vmem:[%s8 + $0x10] sm:$0x1f]
    %v175 = vld [vmem:[%s8 + $0x18] sm:$0x1f]
    %v176 = vld [vmem:[%s8 + $0x20] sm:$0x1f]
    %v177 = vld [vmem:[%s8 + $0x28] sm:$0x1f]
    %v178 = vld [vmem:[%s8 + $0x30] sm:$0x1f]
    %v179 = vld [vmem:[%s8 + $0x38] sm:$0x1f]
    %v180 = vlaneseq
    %v181 = vshrl.u32 %v180, 7
    %v182 = vsub.s32 0, %v181
    %v183 = vrot.slane %v171, %v182
    %185 = vbcast.lane.b32.xlu0 %v183, 256
    %v186 = vpop.permute.xlu0 %185
    %v187 = vlaneseq
    %v188 = vshrl.u32 %v187, 7
    %v189 = vsub.s32 1, %v188
    %v190 = vrot.slane %v171, %v189
    %192 = vbcast.lane.b32.xlu0 %v190, 256
    %v193 = vpop.permute.xlu0 %192
    %v194 = vlaneseq
    %v195 = vshrl.u32 %v194, 7
    %v196 = vsub.s32 2, %v195
    %v197 = vrot.slane %v171, %v196
    %199 = vbcast.lane.b32.xlu0 %v197, 256
    %v200 = vpop.permute.xlu0 %199
    %v201 = vlaneseq
    %v202 = vshrl.u32 %v201, 7
    %v203 = vsub.s32 3, %v202
    %v204 = vrot.slane %v171, %v203
    %206 = vbcast.lane.b32.xlu0 %v204, 256
    %v207 = vpop.permute.xlu0 %206
    %v208 = vlaneseq
    %v209 = vshrl.u32 %v208, 7
    %v210 = vsub.s32 4, %v209
    %v211 = vrot.slane %v171, %v210
    %213 = vbcast.lane.b32.xlu0 %v211, 256
    %v214 = vpop.permute.xlu0 %213
    %v215 = vlaneseq
    %v216 = vshrl.u32 %v215, 7
    %v217 = vsub.s32 5, %v216
    %v218 = vrot.slane %v171, %v217
    %220 = vbcast.lane.b32.xlu0 %v218, 256
    %v221 = vpop.permute.xlu0 %220
    %v222 = vlaneseq
    %v223 = vshrl.u32 %v222, 7
    %v224 = vsub.s32 6, %v223
    %v225 = vrot.slane %v171, %v224
    %227 = vbcast.lane.b32.xlu0 %v225, 256
    %v228 = vpop.permute.xlu0 %227
    %v229 = vlaneseq
    %v230 = vshrl.u32 %v229, 7
    %v231 = vsub.s32 7, %v230
    %v232 = vrot.slane %v171, %v231
    %234 = vbcast.lane.b32.xlu0 %v232, 256
    %v235 = vpop.permute.xlu0 %234
    %v236 = vmul.f32 %v172, %v186
    %v237 = vmul.f32 %v173, %v193
    %v238 = vmul.f32 %v174, %v200
    %v239 = vmul.f32 %v175, %v207
    %v240 = vmul.f32 %v176, %v214
    %v241 = vmul.f32 %v177, %v221
    %v242 = vmul.f32 %v178, %v228
    %v243 = vmul.f32 %v179, %v235
    %vm244 = vcmask 258048
    %v245 = vsel %vm244, %v236, 0.0
    %v246 = vrot.slane %v245, 4
    %v247 = vadd.f32 %v245, %v246
    %v248 = vrot.slane %v247, 2
    %v249 = vadd.f32 %v247, %v248
    %v250 = vrot.slane %v249, 1
    %v251 = vadd.f32 %v249, %v250
    %v252 = vsel %vm244, %v237, 0.0
    %v253 = vrot.slane %v252, 4
    %v254 = vadd.f32 %v252, %v253
    %v255 = vrot.slane %v254, 2
    %v256 = vadd.f32 %v254, %v255
    %v257 = vrot.slane %v256, 1
    %v258 = vadd.f32 %v256, %v257
    %v259 = vsel %vm244, %v238, 0.0
    %v260 = vrot.slane %v259, 4
    %v261 = vadd.f32 %v259, %v260
    %v262 = vrot.slane %v261, 2
    %v263 = vadd.f32 %v261, %v262
    %v264 = vrot.slane %v263, 1
    %v265 = vadd.f32 %v263, %v264
    %v266 = vsel %vm244, %v239, 0.0
    %v267 = vrot.slane %v266, 4
    %v268 = vadd.f32 %v266, %v267
    %v269 = vrot.slane %v268, 2
    %v270 = vadd.f32 %v268, %v269
    %v271 = vrot.slane %v270, 1
    %v272 = vadd.f32 %v270, %v271
    %v273 = vsel %vm244, %v240, 0.0
    %v274 = vrot.slane %v273, 4
    %v275 = vadd.f32 %v273, %v274
    %v276 = vrot.slane %v275, 2
    %v277 = vadd.f32 %v275, %v276
    %v278 = vrot.slane %v277, 1
    %v279 = vadd.f32 %v277, %v278
    %v280 = vsel %vm244, %v241, 0.0
    %v281 = vrot.slane %v280, 4
    %v282 = vadd.f32 %v280, %v281
    %v283 = vrot.slane %v282, 2
    %v284 = vadd.f32 %v282, %v283
    %v285 = vrot.slane %v284, 1
    %v286 = vadd.f32 %v284, %v285
    %v287 = vsel %vm244, %v242, 0.0
    %v288 = vrot.slane %v287, 4
    %v289 = vadd.f32 %v287, %v288
    %v290 = vrot.slane %v289, 2
    %v291 = vadd.f32 %v289, %v290
    %v292 = vrot.slane %v291, 1
    %v293 = vadd.f32 %v291, %v292
    %v294 = vsel %vm244, %v243, 0.0
    %v295 = vrot.slane %v294, 4
    %v296 = vadd.f32 %v294, %v295
    %v297 = vrot.slane %v296, 2
    %v298 = vadd.f32 %v296, %v297
    %v299 = vrot.slane %v298, 1
    %v300 = vadd.f32 %v298, %v299
    %v301 = vmax.f32 %v160, 1.0
    %303 = vset.pattern.permute.xlu0 0
    %304 = vperm.xlu0 %303, %v301
    %v305 = vpop.permute.xlu0 %304
    %v306 = vrot.slane %v305, 1
    %v307 = vrot.slane %v305, 2
    %v308 = vrot.slane %v305, 3
    %v309 = vrot.slane %v305, 4
    %v310 = vrot.slane %v305, 5
    %v311 = vrot.slane %v305, 6
    %v312 = vrot.slane %v305, 7
    %v321 = vrcp.pop %v305
    %v322 = vmul.f32 %v251, %v321
    %v323 = vrcp.pop %v306
    %v324 = vmul.f32 %v258, %v323
    %v325 = vrcp.pop %v307
    %v326 = vmul.f32 %v265, %v325
    %v327 = vrcp.pop %v308
    %v328 = vmul.f32 %v272, %v327
    %v329 = vrcp.pop %v309
    %v330 = vmul.f32 %v279, %v329
    %v331 = vrcp.pop %v310
    %v332 = vmul.f32 %v286, %v331
    %v333 = vrcp.pop %v311
    %v334 = vmul.f32 %v293, %v333
    %v335 = vrcp.pop %v312
    %v336 = vmul.f32 %v300, %v335
    %v337 = vld [vmem:[%s7] sm:$0xff]
    %338 = vst.msk [vmem:[#allocation2] sm:$0xff] %vm145, %v159
    %340 = vrot.lane.b32.xlu0 %v337, 32
    %v341 = vpop.permute.xlu0 %340
    %vm343 = vcmask 523520
    %344 = vst.msk [vmem:[#allocation2] sm:$0xff] %vm343, %v341
    %v345 = vld [vmem:[#allocation2] sm:$0xff]
    %v346 = vld [vmem:[%s5] sm:$0xff]
    %v347 = vld [vmem:[%s5 + $0x8] sm:$0xff]
    %v348 = vld [vmem:[%s5 + $0x10] sm:$0xff]
    %v349 = vld [vmem:[%s5 + $0x18] sm:$0xff]
    %v350 = vld [vmem:[%s5 + $0x20] sm:$0xff]
    %v351 = vld [vmem:[%s5 + $0x28] sm:$0xff]
    %v352 = vld [vmem:[%s5 + $0x30] sm:$0xff]
    %v353 = vld [vmem:[%s5 + $0x38] sm:$0xff]
    %v354 = vld [vmem:[%s6] sm:$0x1]
    %v356 = vlaneseq
    %v357 = vshrl.u32 %v356, 7
    %v358 = vsub.s32 0, %v357
    %v359 = vrot.slane %v354, %v358
    %vm361 = vcmask 523264
    %v363 = vsel %vm361, %v345, 0
    %365 = vmatprep.subr.mxu0 0.0
    %366 = vmatpush1.msra.mxu0 0.0
    %367 = vmatprep.subr.mxu0 0.0
    %368 = vmatpush1.msra.mxu0 0.0
    %369 = vmatprep.subr.mxu0 0.0
    %370 = vmatpush1.msra.mxu0 0.0
    %371 = vmatprep.subr.mxu0 0.0
    %372 = vmatpush1.msra.mxu0 0.0
    %373 = vmatprep.subr.mxu0 0.0
    %374 = vmatpush1.msra.mxu0 0.0
    %375 = vmatprep.subr.mxu0 0.0
    %376 = vmatpush1.msra.mxu0 0.0
    %377 = vmatprep.subr.mxu0 0.0
    %378 = vmatpush1.msra.mxu0 0.0
    %379 = vmatprep.subr.mxu0 0.0
    %380 = vmatpush1.msra.mxu0 0.0
    %381 = vmatprep.subr.mxu0 0.0
    %382 = vmatpush1.msra.mxu0 %v353
    %383 = vmatprep.subr.mxu0 0.0
    %384 = vmatpush1.msra.mxu0 %v352
    %385 = vmatprep.subr.mxu0 0.0
    %386 = vmatpush1.msra.mxu0 %v351
    %387 = vmatprep.subr.mxu0 0.0
    %388 = vmatpush1.msra.mxu0 %v350
    %389 = vmatprep.subr.mxu0 0.0
    %390 = vmatpush1.msra.mxu0 %v349
    %391 = vmatprep.subr.mxu0 0.0
    %392 = vmatpush1.msra.mxu0 %v348
    %393 = vmatprep.subr.mxu0 0.0
    %394 = vmatpush1.msra.mxu0 %v347
    %395 = vmatprep.subr.mxu0 0.0
    %396 = vmatpush1.msra.mxu0 %v346
    %397 = vmatprep.subr.mxu0 0.0
    %398 = vmatpush2.msra.mxu0 0.0
    %399 = vmatprep.subr.mxu0 0.0
    %400 = vmatpush2.msra.mxu0 0.0
    %401 = vmatprep.subr.mxu0 0.0
    %402 = vmatpush2.msra.mxu0 0.0
    %403 = vmatprep.subr.mxu0 0.0
    %404 = vmatpush2.msra.mxu0 0.0
    %405 = vmatprep.subr.mxu0 0.0
    %406 = vmatpush2.msra.mxu0 0.0
    %407 = vmatprep.subr.mxu0 0.0
    %408 = vmatpush2.msra.mxu0 0.0
    %409 = vmatprep.subr.mxu0 0.0
    %410 = vmatpush2.msra.mxu0 0.0
    %411 = vmatprep.subr.mxu0 0.0
    %412 = vmatpush2.msra.mxu0 0.0
    %413 = vmatprep.subr.mxu0 0.0
    %414 = vmatpush2.msra.mxu0 0.0
    %415 = vmatprep.subr.mxu0 0.0
    %416 = vmatpush2.msra.mxu0 0.0
    %417 = vmatprep.subr.mxu0 0.0
    %418 = vmatpush2.msra.mxu0 0.0
    %419 = vmatprep.subr.mxu0 0.0
    %420 = vmatpush2.msra.mxu0 0.0
    %421 = vmatprep.subr.mxu0 0.0
    %422 = vmatpush2.msra.mxu0 0.0
    %423 = vmatprep.subr.mxu0 0.0
    %424 = vmatpush2.msra.mxu0 0.0
    %425 = vmatprep.subr.mxu0 0.0
    %426 = vmatpush2.msra.mxu0 0.0
    %427 = vmatprep.subr.mxu0 0.0
    %428 = vmatpush2.msra.mxu0 0.0
    %429 = vmatprep.mubr.f32.mxu0 0.0
    %430 = vmatmul.mubr.f32.gmra.mxu0 %v363
    %v431 = vpop.f32.mrf.mxu0
    %v432 = vadd.f32 %v359, %v431
    %v433 = vpop.f32.mrf.mxu0
    %434 = vdwg.mxu0
    %v435 = vxor.u32 %v432, 2147483648
    %v436 = vmul.f32 %v435, 1.442695
    %v437 = vpow.pop %v436
    %v438 = vadd.f32 %v437, 1.0
    %v439 = vrcp.pop %v438
    %v440 = vmul.f32 1.0, %v439
    %v441 = vtanh.pop %v432
    %v442 = vmul.f32 %v440, %v337
    %444 = vrot.lane.b32.xlu0 %v441, 64
    %v445 = vpop.permute.xlu0 %444
    %v447 = vmul.f32 %v440, %v445
    %449 = vrot.lane.b32.xlu0 %v447, 32
    %v450 = vpop.permute.xlu0 %449
    %v452 = vadd.f32 %v442, %v450
    %v453 = vtanh.pop %v452
    %455 = vrot.lane.b32.xlu0 %v453, 64
    %v456 = vpop.permute.xlu0 %455
    %v458 = vmul.f32 %v440, %v456
    %460 = vrot.lane.b32.xlu0 %v458, 32
    %v461 = vpop.permute.xlu0 %460
    %463 = vst.msk [vmem:[%s13] sm:$0xff] %vm145, %v461
    %464 = vst.msk [vmem:[%s13] sm:$0xff] %vm343, %v452
    %v465 = vld [vmem:[%s7] sm:$0xff]
    %466 = vst.msk [vmem:[#allocation2] sm:$0xff] %vm145, %v461
    %468 = vrot.lane.b32.xlu0 %v465, 96
    %v469 = vpop.permute.xlu0 %468
    %471 = vst.msk [vmem:[#allocation2] sm:$0xff] %vm343, %v469
    %v472 = vld [vmem:[#allocation2] sm:$0xff]
    %s473 = scalar_lea.vmem %s5, 64
    %v474 = vld [vmem:[%s473] sm:$0xff]
    %v475 = vld [vmem:[%s473 + $0x8] sm:$0xff]
    %v476 = vld [vmem:[%s473 + $0x10] sm:$0xff]
    %v477 = vld [vmem:[%s473 + $0x18] sm:$0xff]
    %v478 = vld [vmem:[%s473 + $0x20] sm:$0xff]
    %v479 = vld [vmem:[%s473 + $0x28] sm:$0xff]
    %v480 = vld [vmem:[%s473 + $0x30] sm:$0xff]
    %v481 = vld [vmem:[%s473 + $0x38] sm:$0xff]
    %s482 = scalar_lea.vmem %s6, 1
    %v483 = vld [vmem:[%s482] sm:$0x1]
    %v485 = vlaneseq
    %v486 = vshrl.u32 %v485, 7
    %v487 = vsub.s32 0, %v486
    %v488 = vrot.slane %v483, %v487
    %v491 = vsel %vm361, %v472, 0
    %493 = vmatprep.subr.mxu0 0.0
    %494 = vmatpush1.msra.mxu0 0.0
    %495 = vmatprep.subr.mxu0 0.0
    %496 = vmatpush1.msra.mxu0 0.0
    %497 = vmatprep.subr.mxu0 0.0
    %498 = vmatpush1.msra.mxu0 0.0
    %499 = vmatprep.subr.mxu0 0.0
    %500 = vmatpush1.msra.mxu0 0.0
    %501 = vmatprep.subr.mxu0 0.0
    %502 = vmatpush1.msra.mxu0 0.0
    %503 = vmatprep.subr.mxu0 0.0
    %504 = vmatpush1.msra.mxu0 0.0
    %505 = vmatprep.subr.mxu0 0.0
    %506 = vmatpush1.msra.mxu0 0.0
    %507 = vmatprep.subr.mxu0 0.0
    %508 = vmatpush1.msra.mxu0 0.0
    %509 = vmatprep.subr.mxu0 0.0
    %510 = vmatpush1.msra.mxu0 %v481
    %511 = vmatprep.subr.mxu0 0.0
    %512 = vmatpush1.msra.mxu0 %v480
    %513 = vmatprep.subr.mxu0 0.0
    %514 = vmatpush1.msra.mxu0 %v479
    %515 = vmatprep.subr.mxu0 0.0
    %516 = vmatpush1.msra.mxu0 %v478
    %517 = vmatprep.subr.mxu0 0.0
    %518 = vmatpush1.msra.mxu0 %v477
    %519 = vmatprep.subr.mxu0 0.0
    %520 = vmatpush1.msra.mxu0 %v476
    %521 = vmatprep.subr.mxu0 0.0
    %522 = vmatpush1.msra.mxu0 %v475
    %523 = vmatprep.subr.mxu0 0.0
    %524 = vmatpush1.msra.mxu0 %v474
    %525 = vmatprep.subr.mxu0 0.0
    %526 = vmatpush2.msra.mxu0 0.0
    %527 = vmatprep.subr.mxu0 0.0
    %528 = vmatpush2.msra.mxu0 0.0
    %529 = vmatprep.subr.mxu0 0.0
    %530 = vmatpush2.msra.mxu0 0.0
    %531 = vmatprep.subr.mxu0 0.0
    %532 = vmatpush2.msra.mxu0 0.0
    %533 = vmatprep.subr.mxu0 0.0
    %534 = vmatpush2.msra.mxu0 0.0
    %535 = vmatprep.subr.mxu0 0.0
    %536 = vmatpush2.msra.mxu0 0.0
    %537 = vmatprep.subr.mxu0 0.0
    %538 = vmatpush2.msra.mxu0 0.0
    %539 = vmatprep.subr.mxu0 0.0
    %540 = vmatpush2.msra.mxu0 0.0
    %541 = vmatprep.subr.mxu0 0.0
    %542 = vmatpush2.msra.mxu0 0.0
    %543 = vmatprep.subr.mxu0 0.0
    %544 = vmatpush2.msra.mxu0 0.0
    %545 = vmatprep.subr.mxu0 0.0
    %546 = vmatpush2.msra.mxu0 0.0
    %547 = vmatprep.subr.mxu0 0.0
    %548 = vmatpush2.msra.mxu0 0.0
    %549 = vmatprep.subr.mxu0 0.0
    %550 = vmatpush2.msra.mxu0 0.0
    %551 = vmatprep.subr.mxu0 0.0
    %552 = vmatpush2.msra.mxu0 0.0
    %553 = vmatprep.subr.mxu0 0.0
    %554 = vmatpush2.msra.mxu0 0.0
    %555 = vmatprep.subr.mxu0 0.0
    %556 = vmatpush2.msra.mxu0 0.0
    %557 = vmatprep.mubr.f32.mxu0 0.0
    %558 = vmatmul.mubr.f32.gmra.mxu0 %v491
    %v559 = vpop.f32.mrf.mxu0
    %v560 = vadd.f32 %v488, %v559
    %v561 = vpop.f32.mrf.mxu0
    %562 = vdwg.mxu0
    %v563 = vxor.u32 %v560, 2147483648
    %v564 = vmul.f32 %v563, 1.442695
    %v565 = vpow.pop %v564
    %v566 = vadd.f32 %v565, 1.0
    %v567 = vrcp.pop %v566
    %v568 = vmul.f32 1.0, %v567
    %v569 = vtanh.pop %v560
    %570 = vrot.lane.b32.xlu0 %v465, 64
    %v571 = vpop.permute.xlu0 %570
    %v573 = vmul.f32 %v568, %v571
    %575 = vrot.lane.b32.xlu0 %v569, 64
    %v576 = vpop.permute.xlu0 %575
    %v578 = vmul.f32 %v568, %v576
    %580 = vrot.lane.b32.xlu0 %v578, 32
    %v581 = vpop.permute.xlu0 %580
    %v583 = vadd.f32 %v573, %v581
    %v584 = vtanh.pop %v583
    %586 = vrot.lane.b32.xlu0 %v584, 64
    %v587 = vpop.permute.xlu0 %586
    %v589 = vmul.f32 %v568, %v587
    %591 = vrot.lane.b32.xlu0 %v589, 96
    %v592 = vpop.permute.xlu0 %591
    %vm594 = vcmask 785920
    %595 = vst.msk [vmem:[%s13] sm:$0xff] %vm594, %v592
    %597 = vrot.lane.b32.xlu0 %v583, 64
    %v598 = vpop.permute.xlu0 %597
    %vm600 = vcmask 1048320
    %601 = vst.msk [vmem:[%s13] sm:$0xff] %vm600, %v598
    %602 = vrot.lane.b32.xlu0 %v589, 32
    %v603 = vpop.permute.xlu0 %602
    %605 = vst.msk [vmem:[#allocation3] sm:$0xff] %vm145, %v603
    %v614 = vrot.slane %v324, 7
    %vm615 = vcmask 1041409
    %v616 = vsel %vm615, %v614, %v322
    %v617 = vrot.slane %v326, 6
    %vm618 = vcmask 1042434
    %v619 = vsel %vm618, %v617, %v616
    %v620 = vrot.slane %v328, 5
    %vm621 = vcmask 1043459
    %v622 = vsel %vm621, %v620, %v619
    %v623 = vrot.slane %v330, 4
    %vm624 = vcmask 1044484
    %v625 = vsel %vm624, %v623, %v622
    %v626 = vrot.slane %v332, 3
    %vm627 = vcmask 1045509
    %v628 = vsel %vm627, %v626, %v625
    %v629 = vrot.slane %v334, 2
    %vm630 = vcmask 1046534
    %v631 = vsel %vm630, %v629, %v628
    %v632 = vrot.slane %v336, 1
    %vm633 = vcmask 1047559
    %v634 = vsel %vm633, %v632, %v631
    %635 = vrot.lane.b32.xlu0 %v634, 32
    %v636 = vpop.permute.xlu0 %635
    %638 = vst.msk [vmem:[#allocation3] sm:$0xff] %vm343, %v636
    %640 = vrot.lane.b32.xlu0 %v159, 64
    %v641 = vpop.permute.xlu0 %640
    %643 = vst.msk [vmem:[#allocation3] sm:$0xff] %vm594, %v641
    %v644 = vld [vmem:[#allocation3] sm:$0xff]
    %v645 = vld [vmem:[%s10] sm:$0xff]
    %v646 = vld [vmem:[%s10 + $0x8] sm:$0xff]
    %v647 = vld [vmem:[%s10 + $0x10] sm:$0xff]
    %v648 = vld [vmem:[%s10 + $0x18] sm:$0xff]
    %v649 = vld [vmem:[%s10 + $0x20] sm:$0xff]
    %v650 = vld [vmem:[%s10 + $0x28] sm:$0xff]
    %v651 = vld [vmem:[%s10 + $0x30] sm:$0xff]
    %v652 = vld [vmem:[%s10 + $0x38] sm:$0xff]
    %v653 = vld [vmem:[%s10 + $0x40] sm:$0xff]
    %v654 = vld [vmem:[%s10 + $0x48] sm:$0xff]
    %v655 = vld [vmem:[%s10 + $0x50] sm:$0xff]
    %v656 = vld [vmem:[%s10 + $0x58] sm:$0xff]
    %v657 = vld [vmem:[%s11] sm:$0x1]
    %v659 = vlaneseq
    %v660 = vshrl.u32 %v659, 7
    %v661 = vsub.s32 0, %v660
    %v662 = vrot.slane %v657, %v661
    %vm664 = vcmask 785408
    %v666 = vsel %vm664, %v644, 0
    %668 = vmatprep.subr.mxu0 0.0
    %669 = vmatpush1.msra.mxu0 0.0
    %670 = vmatprep.subr.mxu0 0.0
    %671 = vmatpush1.msra.mxu0 0.0
    %672 = vmatprep.subr.mxu0 0.0
    %673 = vmatpush1.msra.mxu0 0.0
    %674 = vmatprep.subr.mxu0 0.0
    %675 = vmatpush1.msra.mxu0 0.0
    %676 = vmatprep.subr.mxu0 0.0
    %677 = vmatpush1.msra.mxu0 %v656
    %678 = vmatprep.subr.mxu0 0.0
    %679 = vmatpush1.msra.mxu0 %v655
    %680 = vmatprep.subr.mxu0 0.0
    %681 = vmatpush1.msra.mxu0 %v654
    %682 = vmatprep.subr.mxu0 0.0
    %683 = vmatpush1.msra.mxu0 %v653
    %684 = vmatprep.subr.mxu0 0.0
    %685 = vmatpush1.msra.mxu0 %v652
    %686 = vmatprep.subr.mxu0 0.0
    %687 = vmatpush1.msra.mxu0 %v651
    %688 = vmatprep.subr.mxu0 0.0
    %689 = vmatpush1.msra.mxu0 %v650
    %690 = vmatprep.subr.mxu0 0.0
    %691 = vmatpush1.msra.mxu0 %v649
    %692 = vmatprep.subr.mxu0 0.0
    %693 = vmatpush1.msra.mxu0 %v648
    %694 = vmatprep.subr.mxu0 0.0
    %695 = vmatpush1.msra.mxu0 %v647
    %696 = vmatprep.subr.mxu0 0.0
    %697 = vmatpush1.msra.mxu0 %v646
    %698 = vmatprep.subr.mxu0 0.0
    %699 = vmatpush1.msra.mxu0 %v645
    %700 = vmatprep.subr.mxu0 0.0
    %701 = vmatpush2.msra.mxu0 0.0
    %702 = vmatprep.subr.mxu0 0.0
    %703 = vmatpush2.msra.mxu0 0.0
    %704 = vmatprep.subr.mxu0 0.0
    %705 = vmatpush2.msra.mxu0 0.0
    %706 = vmatprep.subr.mxu0 0.0
    %707 = vmatpush2.msra.mxu0 0.0
    %708 = vmatprep.subr.mxu0 0.0
    %709 = vmatpush2.msra.mxu0 0.0
    %710 = vmatprep.subr.mxu0 0.0
    %711 = vmatpush2.msra.mxu0 0.0
    %712 = vmatprep.subr.mxu0 0.0
    %713 = vmatpush2.msra.mxu0 0.0
    %714 = vmatprep.subr.mxu0 0.0
    %715 = vmatpush2.msra.mxu0 0.0
    %716 = vmatprep.subr.mxu0 0.0
    %717 = vmatpush2.msra.mxu0 0.0
    %718 = vmatprep.subr.mxu0 0.0
    %719 = vmatpush2.msra.mxu0 0.0
    %720 = vmatprep.subr.mxu0 0.0
    %721 = vmatpush2.msra.mxu0 0.0
    %722 = vmatprep.subr.mxu0 0.0
    %723 = vmatpush2.msra.mxu0 0.0
    %724 = vmatprep.subr.mxu0 0.0
    %725 = vmatpush2.msra.mxu0 0.0
    %726 = vmatprep.subr.mxu0 0.0
    %727 = vmatpush2.msra.mxu0 0.0
    %728 = vmatprep.subr.mxu0 0.0
    %729 = vmatpush2.msra.mxu0 0.0
    %730 = vmatprep.subr.mxu0 0.0
    %731 = vmatpush2.msra.mxu0 0.0
    %732 = vmatprep.mubr.f32.mxu0 0.0
    %733 = vmatmul.mubr.f32.gmra.mxu0 %v666
    %v734 = vpop.f32.mrf.mxu0
    %v735 = vadd.f32 %v662, %v734
    %v736 = vpop.f32.mrf.mxu0
    %737 = vdwg.mxu0
    %vm738 = vcmask 64512
    %739 = vst.msk [vmem:[#allocation4] sm:$0xff] %vm738, %v735
    // Predicated region
    $region50: #{lstm_bot_forward.1} parent=1 // pred_check
      _
    $region51: #{lstm_bot_forward.1} parent=1 // pred_check_branch
      %741 = sbr.rel (0) target = $region53
    $region52: #{lstm_bot_forward.1} parent=1 // pred_region
      %s743 = ssub.s32 128, 128
      %744 = vsyncadd [#allocation5], %s743
      %s746 = sshll.u32 [#allocation4], 4
      %s747 = int_to_ptr.vmem [resolvable:$true] %s746
      %749 = dma.vmem_to_hbm [thread:$0]  %s747, 128, %s12, [#allocation5]
    $region53: #{lstm_bot_forward.1} parent=1 // pred_fallthru
      _
    // Predicated region
    $region54: #{lstm_bot_forward.1} parent=1 // pred_check
      _
    $region55: #{lstm_bot_forward.1} parent=1 // pred_check_branch
      %751 = sbr.rel (0) target = $region57
    $region56: #{lstm_bot_forward.1} parent=1 // pred_region
      _
    $region57: #{lstm_bot_forward.1} parent=1 // pred_fallthru
      _
    // Predicated region
    $region58: #{lstm_bot_forward.1} parent=1 // pred_check
      _
    $region59: #{lstm_bot_forward.1} parent=1 // pred_check_branch
      %753 = sbr.rel (0) target = $region61
    $region60: #{lstm_bot_forward.1} parent=1 // pred_region
      %754 = dma.done [#allocation5], 128
    $region61: #{lstm_bot_forward.1} parent=1 // pred_fallthru
      _
    // Predicated region
    $region62: #{lstm_bot_forward.1} parent=1 // pred_check
      _
    $region63: #{lstm_bot_forward.1} parent=1 // pred_check_branch
      %756 = sbr.rel (0) target = $region65
    $region64: #{lstm_bot_forward.1} parent=1 // pred_region
      _
    $region65: #{lstm_bot_forward.1} parent=1 // pred_fallthru
      _
    %757 = vsyncpa [#allocation5], 1

</llo_original>
